<compile_context>
chip_gen: v7x
topology: tpu7x:2x2x1
jax: 0.10.0
libtpu: 0.0.40
codegen_flags: <defaults>
</compile_context>

<pallas_src>
import functools

import jax
import jax.numpy as jnp
import numpy as np
from jax.experimental import pallas as pl
from jax.experimental.pallas import tpu as pltpu

EPS = 1e-8  # self.epsilon in the PyTorch module


# ----------------------------------------------------------------------------
# Hot path: out[r, :] = x[r, :] * (mu[r] + eps[r] * exp(0.5 * logD[r]))
# ----------------------------------------------------------------------------
def _ib_scale_kernel(x_ref, mu_ref, logd_ref, eps_ref, o_ref):
    # x_ref: (TM, TN) activations;  mu/logd/eps: (TM, 1) per-row scalars.
    std = jnp.exp(0.5 * logd_ref[...])          # (TM, 1) -- tiny EUP work
    z = mu_ref[...] + eps_ref[...] * std        # (TM, 1) reparameterized scale
    # Broadcast along the lane axis; cast on store (keeps math in f32 vregs).
    o_ref[...] = (x_ref[...] * z).astype(o_ref.dtype)


# ----------------------------------------------------------------------------
# KL term: O(C) reduction, independent of x -> its own tiny ungridded kernel.
# ----------------------------------------------------------------------------
def _ib_kld_kernel(mu_ref, logd_ref, kld_ref, *, channels, spatial, kl_mult):
    mu = mu_ref[...]                             # (1, C)
    h_d = jnp.exp(logd_ref[...])                 # (1, C)
    kl_sum = jnp.sum(jnp.log(1.0 + mu * mu / (h_d + EPS)))
    dim = mu_ref.shape[1]
    kld_ref[0, 0] = kl_sum * (channels / dim) * spatial * 0.5 * kl_mult


def _choose_tiles(rows, hw, itemsize, max_tile_bytes=4 * 1024 * 1024):
    """Pick (TM, TN): lane-dense last dim, 8-aligned row tile, VMEM-friendly."""
    # Lane axis: keep HW whole (unmasked vst, no ragged lanes) unless it is a
    # large multiple of 128, in which case tile it at 4096 lanes.
    if hw % 128 == 0 and hw > 4096:
        tn = 4096
    else:
        tn = hw
    max_rows = max(1, max_tile_bytes // (tn * itemsize))
    if max_rows >= rows:
        tm = rows                      # full extent is always a legal block dim
    else:
        tm = max(8, (max_rows // 8) * 8)
    return tm, tn


def information_bottleneck_forward(x, post_z_mu, post_z_logD, eps, kl_mult=1.0):
    """x: (B, C, H, W); post_z_mu/post_z_logD: (C,); eps: (B, C) ~ N(0,1)."""
    B, C, H, W = x.shape
    dim = post_z_mu.shape[0]
    assert C == dim, "x channel count must equal len(post_z_mu) (as in the module)"

    BC, HW = B * C, H * W
    itemsize = jnp.dtype(x.dtype).itemsize

    # Flatten to a 2-D (rows, lanes) streaming layout (free reshape of NCHW).
    x2 = x.reshape(BC, HW)
    mu_col = jnp.broadcast_to(post_z_mu.astype(jnp.float32)[None, :], (B, C)).reshape(BC, 1)
    logd_col = jnp.broadcast_to(post_z_logD.astype(jnp.float32)[None, :], (B, C)).reshape(BC, 1)
    eps_col = eps.astype(jnp.float32).reshape(BC, 1)

    TM, TN = _choose_tiles(BC, HW, itemsize)
    grid = (pl.cdiv(BC, TM), pl.cdiv(HW, TN))

    # VMEM budget: 2 buffers x (x tile + out tile + 3 padded (TM,1) columns).
    tile_bytes = TM * TN * itemsize
    col_bytes = TM * 128 * 4
    vmem_need = 2 * (2 * tile_bytes + 3 * col_bytes) + (2 << 20)
    vmem_limit = int(min(max(vmem_need, 8 << 20), 64 << 20))

    cost = pl.CostEstimate(
        flops=2 * BC * HW,
        transcendentals=BC,
        bytes_accessed=2 * BC * HW * itemsize + 3 * BC * 4,
    )

    out2 = pl.pallas_call(
        _ib_scale_kernel,
        out_shape=jax.ShapeDtypeStruct((BC, HW), x.dtype),
        grid_spec=pltpu.PrefetchScalarGridSpec(
            num_scalar_prefetch=0,
            grid=grid,
            in_specs=[
                pl.BlockSpec((TM, TN), lambda i, j: (i, j)),
                pl.BlockSpec((TM, 1), lambda i, j: (i, 0)),
                pl.BlockSpec((TM, 1), lambda i, j: (i, 0)),
                pl.BlockSpec((TM, 1), lambda i, j: (i, 0)),
            ],
            out_specs=pl.BlockSpec((TM, TN), lambda i, j: (i, j)),
        ),
        compiler_params=pltpu.CompilerParams(
            dimension_semantics=("parallel", "parallel"),
            vmem_limit_bytes=vmem_limit,
        ),
        cost_estimate=cost,
        # NOTE: input_output_aliases={0: 0} could halve peak HBM footprint when
        # the caller no longer needs x; not done here since __main__ reuses x.
    )(x2, mu_col, logd_col, eps_col)

    # KL: tiny O(C) kernel, kept out of the streaming hot path.
    mu2 = post_z_mu.astype(jnp.float32).reshape(1, dim)
    logd2 = post_z_logD.astype(jnp.float32).reshape(1, dim)
    kld = pl.pallas_call(
        functools.partial(
            _ib_kld_kernel, channels=C, spatial=float(HW), kl_mult=float(kl_mult)
        ),
        out_shape=jax.ShapeDtypeStruct((1, 1), jnp.float32),
        in_specs=[
            pl.BlockSpec((1, dim), lambda: (0, 0)),
            pl.BlockSpec((1, dim), lambda: (0, 0)),
        ],
        out_specs=pl.BlockSpec(memory_space=pltpu.SMEM),
    )(mu2, logd2)

    return out2.reshape(B, C, H, W), kld[0, 0]


if __name__ == "__main__":
    B, C, H, W = 2, 4, 16, 16
    init_mag, init_var, kl_mult = 9.0, 0.01, 1.0

    key = jax.random.PRNGKey(0)
    k1, k2, k3, k4, k5 = jax.random.split(key, 5)

    # Deterministic parameter init mirroring the module's __init__:
    post_z_mu = 1.0 + init_var * jax.random.normal(k1, (C,), jnp.float32)
    prior_z_logD = -init_mag + init_var * jax.random.normal(k2, (C,), jnp.float32)  # unused in forward
    post_z_logD = -init_mag + init_var * jax.random.normal(k3, (C,), jnp.float32)

    # Reparameterization noise (torch .normal_() on (bsize, dim))
    eps = jax.random.normal(k4, (B, C), jnp.float32)

    x = jax.random.normal(k5, (B, C, H, W), jnp.float32)

    out, kld = information_bottleneck_forward(x, post_z_mu, post_z_logD, eps, kl_mult)
    out = jax.block_until_ready(out)
    kld = jax.block_until_ready(kld)

    # Pure-JAX reference for correctness
    std_ref = jnp.exp(0.5 * post_z_logD)
    z_ref = post_z_mu[None, :] + eps * std_ref[None, :]
    out_ref = x * z_ref[:, :, None, None]
    h_D = jnp.exp(post_z_logD)
    kld_ref = (
        jnp.sum(jnp.log(1.0 + post_z_mu**2 / (h_D + EPS)))
        * (C / C) * (H * W) * 0.5 * kl_mult
    )

    np.testing.assert_allclose(np.asarray(out), np.asarray(out_ref), rtol=1e-5, atol=1e-6)
    np.testing.assert_allclose(float(kld), float(kld_ref), rtol=1e-5)

    # TODO(synk): the module's `self.tim` counter / cached epsilon are Python-side
    # state; this kernel implements the first-call (tim==0) sampling path.
    print("KERNEL_OK")
</pallas_src>

<mosaic_0001>
module attributes {stable_mosaic.version = 11 : i64} {
  func.func @_ib_scale_kernel(%arg0: i32, %arg1: i32, %arg2: memref<8x256xf32, #tpu.memory_space<vmem>>, %arg3: memref<8x1xf32, #tpu.memory_space<vmem>>, %arg4: memref<8x1xf32, #tpu.memory_space<vmem>>, %arg5: memref<8x1xf32, #tpu.memory_space<vmem>>, %arg6: memref<8x256xf32, #tpu.memory_space<vmem>>) attributes {dimension_semantics = [#tpu.dimension_semantics<parallel>, #tpu.dimension_semantics<parallel>], iteration_bounds = array<i64: 1, 1>, scalar_prefetch = 0 : i64, scratch_operands = 0 : i64, tpu.core_type = #tpu.core_type<tc>, window_params = [{transform_indices = @transform_0, window_bounds = array<i64: 8, 256>}, {transform_indices = @transform_1, window_bounds = array<i64: 8, 1>}, {transform_indices = @transform_2, window_bounds = array<i64: 8, 1>}, {transform_indices = @transform_3, window_bounds = array<i64: 8, 1>}, {transform_indices = @transform_4, window_bounds = array<i64: 8, 256>}]} {
    %c0 = arith.constant 0 : index
    %c0_0 = arith.constant 0 : index
    %0 = vector.load %arg4[%c0, %c0_0] : memref<8x1xf32, #tpu.memory_space<vmem>>, vector<8x1xf32>
    %cst = arith.constant 5.000000e-01 : f32
    %1 = vector.broadcast %cst : f32 to vector<8x1xf32>
    %2 = arith.mulf %1, %0 : vector<8x1xf32>
    %3 = math.exp %2 : vector<8x1xf32>
    %c0_1 = arith.constant 0 : index
    %c0_2 = arith.constant 0 : index
    %4 = vector.load %arg3[%c0_1, %c0_2] : memref<8x1xf32, #tpu.memory_space<vmem>>, vector<8x1xf32>
    %c0_3 = arith.constant 0 : index
    %c0_4 = arith.constant 0 : index
    %5 = vector.load %arg5[%c0_3, %c0_4] : memref<8x1xf32, #tpu.memory_space<vmem>>, vector<8x1xf32>
    %6 = arith.mulf %5, %3 : vector<8x1xf32>
    %7 = arith.addf %4, %6 : vector<8x1xf32>
    %c0_5 = arith.constant 0 : index
    %c0_6 = arith.constant 0 : index
    %8 = vector.load %arg2[%c0_5, %c0_6] : memref<8x256xf32, #tpu.memory_space<vmem>>, vector<8x256xf32>
    %9 = vector.broadcast %7 : vector<8x1xf32> to vector<8x256xf32>
    %10 = arith.mulf %8, %9 : vector<8x256xf32>
    %c0_7 = arith.constant 0 : index
    %c0_8 = arith.constant 0 : index
    %11 = vector.load %arg6[%c0_7, %c0_8] : memref<8x256xf32, #tpu.memory_space<vmem>>, vector<8x256xf32>
    tpu.vector_store %arg6[%c0_7, %c0_8], %10 {strides = array<i32>} : memref<8x256xf32, #tpu.memory_space<vmem>>, vector<8x256xf32>,
    return
  }
  func.func @transform_0(%arg0: i32, %arg1: i32) -> (i32, i32) {
    %c0_i32 = arith.constant 0 : i32
    return %arg0, %arg1 : i32, i32
  }
  func.func @transform_1(%arg0: i32, %arg1: i32) -> (i32, i32) {
    %c0_i32 = arith.constant 0 : i32
    %c0_i32_0 = arith.constant 0 : i32
    return %arg0, %c0_i32 : i32, i32
  }
  func.func @transform_2(%arg0: i32, %arg1: i32) -> (i32, i32) {
    %c0_i32 = arith.constant 0 : i32
    %c0_i32_0 = arith.constant 0 : i32
    return %arg0, %c0_i32 : i32, i32
  }
  func.func @transform_3(%arg0: i32, %arg1: i32) -> (i32, i32) {
    %c0_i32 = arith.constant 0 : i32
    %c0_i32_0 = arith.constant 0 : i32
    return %arg0, %c0_i32 : i32, i32
  }
  func.func @transform_4(%arg0: i32, %arg1: i32) -> (i32, i32) {
    %c0_i32 = arith.constant 0 : i32
    return %arg0, %arg1 : i32, i32
  }
}

</mosaic_0001>

<llo_original>
// kernel: tpu_custom_call.1
$region0: #{tpu_custom_call.1}
  #allocation0 [shape = 'u32[]', space=smem, size = 0x4, offset = 0x4, fixed_abs, tag = 'smem constant byte address 0x4 - core index']
  #allocation1 [shape = 'u32[144,128]{1,0:T(1,128)}', space=vmem, size = 0x12000, scoped, tag = 'internal scratch']
  %s0 = inlined_call_operand.vmem [shape: f32[8,256], index: 0, kind: input, shape index: {}]
  %s1 = inlined_call_operand.vmem [shape: f32[8,1], index: 1, kind: input, shape index: {}]
  %s2 = inlined_call_operand.vmem [shape: f32[8,1], index: 2, kind: input, shape index: {}]
  %s3 = inlined_call_operand.vmem [shape: f32[8,1], index: 3, kind: input, shape index: {}]
  %s4 = inlined_call_operand.hbm [shape: f32[8,256], index: 4, kind: output, shape index: {}]
  %s5 = sld [smem:[#allocation0]]
  $region26: #{tpu_custom_call.1} parent=0
    _
  %s7 = ssub.s32 1, %s5
  %s8 = scalar_select 0, %s7, %s5
  $region1: #{tpu_custom_call.1} parent=0
    #allocation2 [shape = 'u8[8192]{0}', space=vmem, size = 0x2000, scoped, tag = 'output window, operand 0, single buffered']
    #allocation3 [shape = 's32[1]{0}', space=sflag, size = 0x4, scoped, tag = 'scoped memory for tpu_custom_call.1']
    %9 = vsyncpa [#allocation3], 0
    // Predicated region
    $region2: #{tpu_custom_call.1} parent=1 // pred_check
      _
    $region3: #{tpu_custom_call.1} parent=1 // pred_check_branch
      %11 = sbr.rel (0) target = $region5
    $region4: #{tpu_custom_call.1} parent=1 // pred_region
      _
    $region5: #{tpu_custom_call.1} parent=1 // pred_fallthru
      _
    // Predicated region
    $region6: #{tpu_custom_call.1} parent=1 // pred_check
      _
    $region7: #{tpu_custom_call.1} parent=1 // pred_check_branch
      %13 = sbr.rel (0) target = $region9
    $region8: #{tpu_custom_call.1} parent=1 // pred_region
      _
    $region9: #{tpu_custom_call.1} parent=1 // pred_fallthru
      _
    // Predicated region
    $region10: #{tpu_custom_call.1} parent=1 // pred_check
      _
    $region11: #{tpu_custom_call.1} parent=1 // pred_check_branch
      %15 = sbr.rel (0) target = $region13
    $region12: #{tpu_custom_call.1} parent=1 // pred_region
      _
    $region13: #{tpu_custom_call.1} parent=1 // pred_fallthru
      _
    // Predicated region
    $region14: #{tpu_custom_call.1} parent=1 // pred_check
      _
    $region15: #{tpu_custom_call.1} parent=1 // pred_check_branch
      %17 = sbr.rel (0) target = $region17
    $region16: #{tpu_custom_call.1} parent=1 // pred_region
      _
    $region17: #{tpu_custom_call.1} parent=1 // pred_fallthru
      _
    %v18 = vld [vmem:[%s2] sm:$0xff]
    %v19 = vmul.f32 %v18, 0.5
    %v20 = vmul.f32 %v19, 1.442695
    %v21 = vpow.pop %v20
    %v22 = vld [vmem:[%s1] sm:$0xff]
    %v23 = vld [vmem:[%s3] sm:$0xff]
    %v24 = vmul.f32 %v23, %v21
    %v25 = vadd.f32 %v22, %v24
    %v26 = vld [vmem:[%s0] sm:$0xff]
    %v27 = vld [vmem:[%s0 + $0x8] sm:$0xff]
    %29 = vset.pattern.permute.xlu0 0
    %30 = vperm.xlu0 %29, %v25
    %v31 = vpop.permute.xlu0 %30
    %v33 = vmul.f32 %v26, %v31
    %v34 = vmul.f32 %v27, %v31
    %35 = vst [vmem:[#allocation2] sm:$0xff] %v33
    %36 = vst [vmem:[#allocation2 + $0x8] sm:$0xff] %v34
    // Predicated region
    $region18: #{tpu_custom_call.1} parent=1 // pred_check
      _
    $region19: #{tpu_custom_call.1} parent=1 // pred_check_branch
      %38 = sbr.rel (0) target = $region21
    $region20: #{tpu_custom_call.1} parent=1 // pred_region
      %s40 = ssub.s32 256, 256
      %41 = vsyncadd [#allocation3], %s40
      %s43 = sshll.u32 [#allocation2], 4
      %s44 = int_to_ptr.vmem [resolvable:$true] %s43
      %46 = dma.vmem_to_hbm [thread:$0]  %s44, 256, %s4, [#allocation3]
    $region21: #{tpu_custom_call.1} parent=1 // pred_fallthru
      _
    // Predicated region
    $region22: #{tpu_custom_call.1} parent=1 // pred_check
      _
    $region23: #{tpu_custom_call.1} parent=1 // pred_check_branch
      %48 = sbr.rel (0) target = $region25
    $region24: #{tpu_custom_call.1} parent=1 // pred_region
      %49 = dma.done [#allocation3], 256
    $region25: #{tpu_custom_call.1} parent=1 // pred_fallthru
      _
    %50 = vsyncpa [#allocation3], 1

</llo_original>
